<compile_context>
chip_gen: v6e
topology: v6e:2x2x1
jax: 0.10.0
libtpu: 0.0.40
codegen_flags: <defaults>
</compile_context>

<pallas_src>
import math

import jax
import jax.numpy as jnp
import numpy as np
from jax.experimental import pallas as pl
from jax.experimental.pallas import tpu as pltpu


# ---------------------------------------------------------------------------
# Kernels: tiled  out = x @ W + b  (f32 accumulation on the MXU)
# Grid = (M_tiles, N_tiles, K_tiles); K (reduction) last, "arbitrary";
# M/N tiles "parallel" so v7x can shard them across its 2 TensorCores.
# ---------------------------------------------------------------------------
def _matmul_bias_kernel_f32out(x_ref, w_ref, b_ref, o_ref):
    """f32 output: o_ref itself is the K-accumulator (no scratch, no copy)."""
    k = pl.program_id(2)

    @pl.when(k == 0)
    def _():
        o_ref[...] = jnp.zeros_like(o_ref)

    o_ref[...] += jnp.dot(
        x_ref[...], w_ref[...], preferred_element_type=jnp.float32
    )

    @pl.when(k == pl.num_programs(2) - 1)
    def _():
        o_ref[...] = o_ref[...] + b_ref[...]


def _matmul_bias_kernel_scratch(x_ref, w_ref, b_ref, o_ref, acc_ref):
    """Narrow output dtypes: accumulate in an f32 VMEM scratch, cast at the end."""
    k = pl.program_id(2)

    @pl.when(k == 0)
    def _():
        acc_ref[...] = jnp.zeros_like(acc_ref)

    acc_ref[...] += jnp.dot(
        x_ref[...], w_ref[...], preferred_element_type=jnp.float32
    )

    @pl.when(k == pl.num_programs(2) - 1)
    def _():
        o_ref[...] = (acc_ref[...] + b_ref[...]).astype(o_ref.dtype)


# ---------------------------------------------------------------------------
# Tiling / device helpers
# ---------------------------------------------------------------------------
def _round_up(x: int, m: int) -> int:
    return ((x + m - 1) // m) * m


def _device_info():
    """Returns (tile_vmem_budget_bytes, vmem_limit_bytes, want_multi_tc_split)."""
    kind = ""
    try:
        kind = jax.devices()[0].device_kind.lower()
    except Exception:
        pass
    if "v7" in kind:
        # v7x: 64 MiB VMEM per TensorCore, 2 TCs per chip.
        return 40 * 1024 * 1024, 48 * 1024 * 1024, True
    # v5e / v6e: 128 MiB VMEM, single TensorCore.
    return 80 * 1024 * 1024, 100 * 1024 * 1024, False


def _select_tiles(M, K, N, bpe_in, bpe_out, budget, split_parallel):
    """Largest (tm, tk, tn) whose double-buffered footprint fits `budget`."""
    m_align = 16 if bpe_in < 4 else 8

    def footprint(tm, tk, tn):
        in_b = 2 * (tm * tk + tk * tn) * bpe_in     # double-buffered x / W tiles
        out_b = 2 * tm * tn * bpe_out               # double-buffered output tile
        acc_b = tm * tn * 4                         # f32 accumulator (worst case)
        bias_b = 2 * tn * 4
        return in_b + out_b + acc_b + bias_b

    tm_cands = [t for t in (1024, 512, 256, 128, 64, 32, 16, 8)
                if t <= _round_up(M, m_align)]
    tn_cands = [t for t in (1024, 512, 256, 128) if t <= _round_up(N, 128)]
    tk_cands = [t for t in (1024, 512, 256, 128) if t <= _round_up(K, 128)]

    tm, tk, tn = tm_cands[-1], tk_cands[-1], tn_cands[-1]
    done = False
    for cand_tn in tn_cands:            # prefer wide, lane-dense output tiles
        for cand_tm in tm_cands:        # then tall M tiles (fewer W re-reads)
            for cand_tk in tk_cands:
                if footprint(cand_tm, cand_tk, cand_tn) <= budget:
                    tm, tk, tn = cand_tm, cand_tk, cand_tn
                    done = True
                    break
            if done:
                break
        if done:
            break

    if split_parallel:
        # v7x has 2 TensorCores sharded along "parallel" grid axes: make sure
        # there are at least 2 blocks of parallel work.
        def n_parallel_blocks(tm_, tn_):
            return (_round_up(M, tm_) // tm_) * (_round_up(N, tn_) // tn_)

        while n_parallel_blocks(tm, tn) < 2:
            if tn >= 256:
                tn //= 2
            elif tm >= 2 * m_align:
                tm //= 2
            else:
                break
    return tm, tk, tn


# ---------------------------------------------------------------------------
# Wrapper
# ---------------------------------------------------------------------------
def fold_cardinal_params(weights, biases, *, residual, matmul_dtype=jnp.bfloat16):
    """Fold the C branch Linears (+ residual identity + 1/sqrt scale) into one
    effective (in_dim, out_dim) weight and (1, out_dim) f32 bias.

    O(C*in*out) one-off work. For inference, compute ONCE and reuse across
    forward calls (otherwise every call re-reads all C weights from HBM).
    """
    C, out_dim, in_dim = weights.shape
    w_sum = jnp.sum(weights.astype(jnp.float32), axis=0)      # (out_dim, in_dim)
    b_sum = jnp.sum(biases.astype(jnp.float32), axis=0)       # (out_dim,)
    if residual:
        assert in_dim == out_dim, "residual Linear requires in_dim == out_dim"
        scale = 1.0 / math.sqrt(C + 1)
        w_eff = (w_sum + jnp.eye(out_dim, dtype=jnp.float32)) * scale
    else:
        scale = 1.0 / math.sqrt(C)
        w_eff = w_sum * scale
    w_t = jnp.transpose(w_eff).astype(matmul_dtype)           # (in_dim, out_dim)
    b_eff = (b_sum * scale).reshape(1, out_dim).astype(jnp.float32)
    return w_t, b_eff


def cardinal_matmul(x, w_t, b_eff):
    """out[B, out_dim] = x @ w_t + b_eff  as a tiled Pallas TPU matmul."""
    B, in_dim = x.shape
    k_dim, out_dim = w_t.shape
    assert k_dim == in_dim

    matmul_dtype = w_t.dtype
    out_dtype = x.dtype
    x_mm = x.astype(matmul_dtype)

    bpe_in = jnp.dtype(matmul_dtype).itemsize
    bpe_out = jnp.dtype(out_dtype).itemsize

    budget, vmem_limit, multi_tc = _device_info()
    tm, tk, tn = _select_tiles(B, in_dim, out_dim, bpe_in, bpe_out,
                               budget, multi_tc)

    M_pad = _round_up(B, tm)
    K_pad = _round_up(in_dim, tk)
    N_pad = _round_up(out_dim, tn)

    if (M_pad, K_pad) != (B, in_dim):
        x_mm = jnp.pad(x_mm, ((0, M_pad - B), (0, K_pad - in_dim)))
    if (K_pad, N_pad) != (in_dim, out_dim):
        w_t = jnp.pad(w_t, ((0, K_pad - in_dim), (0, N_pad - out_dim)))
    if N_pad != out_dim:
        b_eff = jnp.pad(b_eff, ((0, 0), (0, N_pad - out_dim)))

    grid = (M_pad // tm, N_pad // tn, K_pad // tk)

    f32_out = out_dtype == jnp.float32
    kernel = _matmul_bias_kernel_f32out if f32_out else _matmul_bias_kernel_scratch
    scratch = [] if f32_out else [pltpu.VMEM((tm, tn), jnp.float32)]

    cost = pl.CostEstimate(
        flops=2 * M_pad * K_pad * N_pad,
        transcendentals=0,
        bytes_accessed=(M_pad * K_pad * bpe_in + K_pad * N_pad * bpe_in
                        + N_pad * 4 + M_pad * N_pad * bpe_out),
    )

    out = pl.pallas_call(
        kernel,
        out_shape=jax.ShapeDtypeStruct((M_pad, N_pad), out_dtype),
        grid_spec=pltpu.PrefetchScalarGridSpec(
            num_scalar_prefetch=0,
            grid=grid,
            in_specs=[
                pl.BlockSpec((tm, tk), lambda i, j, k: (i, k)),   # x tile
                pl.BlockSpec((tk, tn), lambda i, j, k: (k, j)),   # W tile
                pl.BlockSpec((1, tn), lambda i, j, k: (0, j)),    # bias tile
            ],
            out_specs=pl.BlockSpec((tm, tn), lambda i, j, k: (i, j)),
            scratch_shapes=scratch,
        ),
        compiler_params=pltpu.CompilerParams(
            dimension_semantics=("parallel", "parallel", "arbitrary"),
            vmem_limit_bytes=vmem_limit,
        ),
        cost_estimate=cost,
    )(x_mm, w_t, b_eff)

    if (M_pad, N_pad) != (B, out_dim):
        out = out[:B, :out_dim]
    return out


def cardinal_wrapper_forward(x, weights, biases, *, residual,
                             matmul_dtype=jnp.bfloat16):
    """One-shot convenience path (fold + matmul). For repeated calls with the
    same weights, call fold_cardinal_params() once and reuse cardinal_matmul."""
    w_t, b_eff = fold_cardinal_params(weights, biases, residual=residual,
                                      matmul_dtype=matmul_dtype)
    return cardinal_matmul(x, w_t, b_eff)


def cardinal_wrapper_reference(x, weights, biases, *, residual):
    """Pure-JAX reference matching the PyTorch forward exactly (stack-then-sum)."""
    C = weights.shape[0]
    x32 = x.astype(jnp.float32)
    feats = jnp.stack(
        [x32 @ weights[c].astype(jnp.float32).T + biases[c].astype(jnp.float32)
         for c in range(C)], axis=0
    ).sum(0)
    if residual:
        return (x32 + feats) / math.sqrt(C + 1)
    return feats / math.sqrt(C)


if __name__ == "__main__":
    # Small but lane-dense shapes (multiples of 128) so MXU tiles are full and
    # output stores are unmasked.
    B = 128
    in_dim = 256
    out_dim = 256          # must equal in_dim for the residual Linear path
    cardinality = 4
    residual = True

    key = jax.random.PRNGKey(0)
    kx, kw, kb = jax.random.split(key, 3)

    x = jax.random.normal(kx, (B, in_dim), dtype=jnp.float32)

    # Deterministic per-branch Linear params (PyTorch-style uniform bound).
    bound = 1.0 / math.sqrt(in_dim)
    weights = jax.random.uniform(
        kw, (cardinality, out_dim, in_dim), minval=-bound, maxval=bound,
        dtype=jnp.float32,
    )
    biases = jax.random.uniform(
        kb, (cardinality, out_dim), minval=-bound, maxval=bound,
        dtype=jnp.float32,
    )

    ref = np.asarray(
        cardinal_wrapper_reference(x, weights, biases, residual=residual))

    # 1) f32 MXU operands: tight tolerance (validates structure / fold).
    w_t32, b_eff = fold_cardinal_params(weights, biases, residual=residual,
                                        matmul_dtype=jnp.float32)
    out_f32 = jax.block_until_ready(cardinal_matmul(x, w_t32, b_eff))
    np.testing.assert_allclose(np.asarray(out_f32), ref, rtol=1e-5, atol=1e-5)

    # 2) Default fast path: bf16 operands, f32 accumulate, f32 output.
    w_t16, b_eff16 = fold_cardinal_params(weights, biases, residual=residual,
                                          matmul_dtype=jnp.bfloat16)
    out_bf16op = jax.block_until_ready(cardinal_matmul(x, w_t16, b_eff16))
    np.testing.assert_allclose(np.asarray(out_bf16op), ref, rtol=5e-2, atol=5e-2)

    # 3) bf16 activations + bf16 output (exercises the scratch-accumulator kernel).
    out_bf16 = jax.block_until_ready(
        cardinal_matmul(x.astype(jnp.bfloat16), w_t16, b_eff16))
    np.testing.assert_allclose(np.asarray(out_bf16, dtype=np.float32), ref,
                               rtol=6e-2, atol=6e-2)

    # TODO(synk): Conv2d-branch variant of CardinalWrapper (conv2d_identity
    # residual) is not implemented; only the nn.Linear layer path is covered.
    print("KERNEL_OK")
</pallas_src>

<mosaic_0001>
module attributes {stable_mosaic.version = 11 : i64} {
  func.func @_matmul_bias_kernel_f32out(%arg0: i32, %arg1: i32, %arg2: i32, %arg3: memref<128x256xf32, #tpu.memory_space<vmem>>, %arg4: memref<256x256xf32, #tpu.memory_space<vmem>>, %arg5: memref<1x256xf32, #tpu.memory_space<vmem>>, %arg6: memref<128x256xf32, #tpu.memory_space<vmem>>) attributes {dimension_semantics = [#tpu.dimension_semantics<parallel>, #tpu.dimension_semantics<parallel>, #tpu.dimension_semantics<arbitrary>], iteration_bounds = array<i64: 1, 1, 1>, scalar_prefetch = 0 : i64, scratch_operands = 0 : i64, tpu.core_type = #tpu.core_type<tc>, window_params = [{transform_indices = @transform_0, window_bounds = array<i64: 128, 256>}, {transform_indices = @transform_1, window_bounds = array<i64: 256, 256>}, {transform_indices = @transform_2, window_bounds = array<i64: 1, 256>}, {transform_indices = @transform_3, window_bounds = array<i64: 128, 256>}]} {
    %c0_i32 = arith.constant 0 : i32
    %0 = arith.cmpi eq, %arg2, %c0_i32 : i32
    %1 = arith.extui %0 : i1 to i32
    %c0_i32_0 = arith.constant 0 : i32
    %2 = arith.cmpi ne, %1, %c0_i32_0 : i32
    scf.if %2 {
      %cst_10 = arith.constant 0.000000e+00 : f32
      %12 = vector.broadcast %cst_10 : f32 to vector<128x256xf32>
      %c0_11 = arith.constant 0 : index
      %c0_12 = arith.constant 0 : index
      %13 = vector.load %arg6[%c0_11, %c0_12] : memref<128x256xf32, #tpu.memory_space<vmem>>, vector<128x256xf32>
      tpu.vector_store %arg6[%c0_11, %c0_12], %12 {strides = array<i32>} : memref<128x256xf32, #tpu.memory_space<vmem>>, vector<128x256xf32>,
    } else {
    }
    %c0 = arith.constant 0 : index
    %c0_1 = arith.constant 0 : index
    %3 = vector.load %arg6[%c0, %c0_1] : memref<128x256xf32, #tpu.memory_space<vmem>>, vector<128x256xf32>
    %c0_2 = arith.constant 0 : index
    %c0_3 = arith.constant 0 : index
    %4 = vector.load %arg3[%c0_2, %c0_3] : memref<128x256xf32, #tpu.memory_space<vmem>>, vector<128x256xf32>
    %c0_4 = arith.constant 0 : index
    %c0_5 = arith.constant 0 : index
    %5 = vector.load %arg4[%c0_4, %c0_5] : memref<256x256xf32, #tpu.memory_space<vmem>>, vector<256x256xf32>
    %cst = arith.constant dense<0.000000e+00> : vector<128x256xf32>
    %6 = tpu.matmul %4, %5, %cst {dimension_numbers = #tpu.dot_dimension_numbers<[1], [0], [0], [1], [0, 0, 1, 1], [], []>} : vector<128x256xf32>, vector<256x256xf32>, vector<128x256xf32> -> vector<128x256xf32>
    %7 = arith.addf %3, %6 : vector<128x256xf32>
    %c0_6 = arith.constant 0 : index
    %c0_7 = arith.constant 0 : index
    %8 = vector.load %arg6[%c0_6, %c0_7] : memref<128x256xf32, #tpu.memory_space<vmem>>, vector<128x256xf32>
    tpu.vector_store %arg6[%c0_6, %c0_7], %7 {strides = array<i32>} : memref<128x256xf32, #tpu.memory_space<vmem>>, vector<128x256xf32>,
    %c0_i32_8 = arith.constant 0 : i32
    %9 = arith.cmpi eq, %arg2, %c0_i32_8 : i32
    %10 = arith.extui %9 : i1 to i32
    %c0_i32_9 = arith.constant 0 : i32
    %11 = arith.cmpi ne, %10, %c0_i32_9 : i32
    scf.if %11 {
      %c0_10 = arith.constant 0 : index
      %c0_11 = arith.constant 0 : index
      %12 = vector.load %arg6[%c0_10, %c0_11] : memref<128x256xf32, #tpu.memory_space<vmem>>, vector<128x256xf32>
      %c0_12 = arith.constant 0 : index
      %c0_13 = arith.constant 0 : index
      %13 = vector.load %arg5[%c0_12, %c0_13] : memref<1x256xf32, #tpu.memory_space<vmem>>, vector<1x256xf32>
      %14 = vector.broadcast %13 : vector<1x256xf32> to vector<128x256xf32>
      %15 = arith.addf %12, %14 : vector<128x256xf32>
      %c0_14 = arith.constant 0 : index
      %c0_15 = arith.constant 0 : index
      %16 = vector.load %arg6[%c0_14, %c0_15] : memref<128x256xf32, #tpu.memory_space<vmem>>, vector<128x256xf32>
      tpu.vector_store %arg6[%c0_14, %c0_15], %15 {strides = array<i32>} : memref<128x256xf32, #tpu.memory_space<vmem>>, vector<128x256xf32>,
    } else {
    }
    return
  }
  func.func @transform_0(%arg0: i32, %arg1: i32, %arg2: i32) -> (i32, i32) {
    %c0_i32 = arith.constant 0 : i32
    return %arg0, %arg2 : i32, i32
  }
  func.func @transform_1(%arg0: i32, %arg1: i32, %arg2: i32) -> (i32, i32) {
    %c0_i32 = arith.constant 0 : i32
    return %arg2, %arg1 : i32, i32
  }
  func.func @transform_2(%arg0: i32, %arg1: i32, %arg2: i32) -> (i32, i32) {
    %c0_i32 = arith.constant 0 : i32
    %c0_i32_0 = arith.constant 0 : i32
    return %c0_i32, %arg1 : i32, i32
  }
  func.func @transform_3(%arg0: i32, %arg1: i32, %arg2: i32) -> (i32, i32) {
    %c0_i32 = arith.constant 0 : i32
    return %arg0, %arg1 : i32, i32
  }
}

</mosaic_0001>

<llo_original>
// kernel: tpu_custom_call.1
$region0: #{tpu_custom_call.1}
  #allocation0 [shape = 'u32[]', space=smem, size = 0x4, offset = 0x4, fixed_abs, tag = 'smem constant byte address 0x4 - core index']
  #allocation1 [shape = 'u32[144,128]{1,0:T(1,128)}', space=vmem, size = 0x12000, scoped, tag = 'internal scratch']
  %s0 = inlined_call_operand.hbm [shape: f32[128,256], index: 0, kind: input, shape index: {}]
  %s1 = inlined_call_operand.hbm [shape: f32[256,256], index: 1, kind: input, shape index: {}]
  %s2 = inlined_call_operand.vmem [shape: f32[1,256], index: 2, kind: input, shape index: {}]
  %s3 = inlined_call_operand.hbm [shape: f32[128,256], index: 3, kind: output, shape index: {}]
  %s4 = sld [smem:[#allocation0]]
  $region38: #{tpu_custom_call.1} parent=0
    _
  %s6 = ssub.s32 1, %s4
  %s7 = scalar_select 0, %s6, %s4
  $region1: #{tpu_custom_call.1} parent=0
    #allocation2 [shape = 'u8[131072]{0}', space=vmem, size = 0x20000, scoped, tag = 'input window, operand 0, single buffered']
    #allocation3 [shape = 's32[1]{0}', space=sflag, size = 0x4, scoped, tag = 'scoped memory for tpu_custom_call.1']
    #allocation4 [shape = 's32[1]{0}', space=sflag, size = 0x4, scoped, tag = 'scoped memory for tpu_custom_call.1']
    #allocation5 [shape = 'u8[262144]{0}', space=vmem, size = 0x40000, scoped, tag = 'input window, operand 1, single buffered']
    #allocation6 [shape = 's32[1]{0}', space=sflag, size = 0x4, scoped, tag = 'scoped memory for tpu_custom_call.1']
    #allocation7 [shape = 'u8[131072]{0}', space=vmem, size = 0x20000, scoped, tag = 'output window, operand 0, single buffered']
    %8 = vsyncpa [#allocation3], 0
    %9 = vsyncpa [#allocation6], 0
    %10 = vsyncpa [#allocation4], 0
    // Predicated region
    $region2: #{tpu_custom_call.1} parent=1 // pred_check
      _
    $region3: #{tpu_custom_call.1} parent=1 // pred_check_branch
      %12 = sbr.rel (0) target = $region5
    $region4: #{tpu_custom_call.1} parent=1 // pred_region
      %s14 = ssub.s32 4096, 4096
      %15 = vsyncadd [#allocation3], %s14
      %s16 = sshll.u32 [#allocation2], 4
      %s17 = int_to_ptr.vmem [resolvable:$true] %s16
      %22 = dma.hbm_to_vmem [thread:$0]  %s0, 4096, %s17, [#allocation3], 256, 256, 16
    $region5: #{tpu_custom_call.1} parent=1 // pred_fallthru
      _
    // Predicated region
    $region6: #{tpu_custom_call.1} parent=1 // pred_check
      _
    $region7: #{tpu_custom_call.1} parent=1 // pred_check_branch
      %24 = sbr.rel (0) target = $region9
    $region8: #{tpu_custom_call.1} parent=1 // pred_region
      %s26 = ssub.s32 8192, 8192
      %27 = vsyncadd [#allocation6], %s26
      %s28 = sshll.u32 [#allocation5], 4
      %s29 = int_to_ptr.vmem [resolvable:$true] %s28
      %34 = dma.hbm_to_vmem [thread:$0]  %s1, 8192, %s29, [#allocation6], 256, 256, 16
    $region9: #{tpu_custom_call.1} parent=1 // pred_fallthru
      _
    // Predicated region
    $region10: #{tpu_custom_call.1} parent=1 // pred_check
      _
    $region11: #{tpu_custom_call.1} parent=1 // pred_check_branch
      %36 = sbr.rel (0) target = $region13
    $region12: #{tpu_custom_call.1} parent=1 // pred_region
      _
    $region13: #{tpu_custom_call.1} parent=1 // pred_fallthru
      _
    // Predicated region
    $region14: #{tpu_custom_call.1} parent=1 // pred_check
      _
    $region15: #{tpu_custom_call.1} parent=1 // pred_check_branch
      %38 = sbr.rel (0) target = $region17
    $region16: #{tpu_custom_call.1} parent=1 // pred_region
      %39 = dma.done [#allocation3], 4096
    $region17: #{tpu_custom_call.1} parent=1 // pred_fallthru
      _
    // Predicated region
    $region18: #{tpu_custom_call.1} parent=1 // pred_check
      _
    $region19: #{tpu_custom_call.1} parent=1 // pred_check_branch
      %41 = sbr.rel (0) target = $region21
    $region20: #{tpu_custom_call.1} parent=1 // pred_region
      %42 = dma.done [#allocation6], 8192
    $region21: #{tpu_custom_call.1} parent=1 // pred_fallthru
      _
    %p43 = scmp.eq.s32.totalorder 0, 0
    // Predicated region
    $region22: #{tpu_custom_call.1} parent=1 // pred_check
      %p44 = pneg %p43
    $region23: #{tpu_custom_call.1} parent=1 // pred_check_branch
      %46 = sbr.rel (%p44) target = $region25
    $region24: #{tpu_custom_call.1} parent=1 // pred_region
      %47 = vst [vmem:[#allocation7] sm:$0xff] 0.0
      %48 = vst [vmem:[#allocation7 + $0x8] sm:$0xff] 0.0
      %49 = vst [vmem:[#allocation7 + $0x10] sm:$0xff] 0.0
      %50 = vst [vmem:[#allocation7 + $0x18] sm:$0xff] 0.0
      %51 = vst [vmem:[#allocation7 + $0x20] sm:$0xff] 0.0
      %52 = vst [vmem:[#allocation7 + $0x28] sm:$0xff] 0.0
      %53 = vst [vmem:[#allocation7 + $0x30] sm:$0xff] 0.0
      %54 = vst [vmem:[#allocation7 + $0x38] sm:$0xff] 0.0
      %55 = vst [vmem:[#allocation7 + $0x40] sm:$0xff] 0.0
      %56 = vst [vmem:[#allocation7 + $0x48] sm:$0xff] 0.0
      %57 = vst [vmem:[#allocation7 + $0x50] sm:$0xff] 0.0
      %58 = vst [vmem:[#allocation7 + $0x58] sm:$0xff] 0.0
      %59 = vst [vmem:[#allocation7 + $0x60] sm:$0xff] 0.0
      %60 = vst [vmem:[#allocation7 + $0x68] sm:$0xff] 0.0
      %61 = vst [vmem:[#allocation7 + $0x70] sm:$0xff] 0.0
      %62 = vst [vmem:[#allocation7 + $0x78] sm:$0xff] 0.0
      %63 = vst [vmem:[#allocation7 + $0x80] sm:$0xff] 0.0
      %64 = vst [vmem:[#allocation7 + $0x88] sm:$0xff] 0.0
      %65 = vst [vmem:[#allocation7 + $0x90] sm:$0xff] 0.0
      %66 = vst [vmem:[#allocation7 + $0x98] sm:$0xff] 0.0
      %67 = vst [vmem:[#allocation7 + $0xa0] sm:$0xff] 0.0
      %68 = vst [vmem:[#allocation7 + $0xa8] sm:$0xff] 0.0
      %69 = vst [vmem:[#allocation7 + $0xb0] sm:$0xff] 0.0
      %70 = vst [vmem:[#allocation7 + $0xb8] sm:$0xff] 0.0
      %71 = vst [vmem:[#allocation7 + $0xc0] sm:$0xff] 0.0
      %72 = vst [vmem:[#allocation7 + $0xc8] sm:$0xff] 0.0
      %73 = vst [vmem:[#allocation7 + $0xd0] sm:$0xff] 0.0
      %74 = vst [vmem:[#allocation7 + $0xd8] sm:$0xff] 0.0
      %75 = vst [vmem:[#allocation7 + $0xe0] sm:$0xff] 0.0
      %76 = vst [vmem:[#allocation7 + $0xe8] sm:$0xff] 0.0
      %77 = vst [vmem:[#allocation7 + $0xf0] sm:$0xff] 0.0
      %78 = vst [vmem:[#allocation7 + $0xf8] sm:$0xff] 0.0
    $region25: #{tpu_custom_call.1} parent=1 // pred_fallthru
      _
    %v79 = vld [vmem:[#allocation7] sm:$0xff]
    %v80 = vld [vmem:[#allocation7 + $0x8] sm:$0xff]
    %v81 = vld [vmem:[#allocation7 + $0x10] sm:$0xff]
    %v82 = vld [vmem:[#allocation7 + $0x18] sm:$0xff]
    %v83 = vld [vmem:[#allocation7 + $0x20] sm:$0xff]
    %v84 = vld [vmem:[#allocation7 + $0x28] sm:$0xff]
    %v85 = vld [vmem:[#allocation7 + $0x30] sm:$0xff]
    %v86 = vld [vmem:[#allocation7 + $0x38] sm:$0xff]
    %v87 = vld [vmem:[#allocation7 + $0x40] sm:$0xff]
    %v88 = vld [vmem:[#allocation7 + $0x48] sm:$0xff]
    %v89 = vld [vmem:[#allocation7 + $0x50] sm:$0xff]
    %v90 = vld [vmem:[#allocation7 + $0x58] sm:$0xff]
    %v91 = vld [vmem:[#allocation7 + $0x60] sm:$0xff]
    %v92 = vld [vmem:[#allocation7 + $0x68] sm:$0xff]
    %v93 = vld [vmem:[#allocation7 + $0x70] sm:$0xff]
    %v94 = vld [vmem:[#allocation7 + $0x78] sm:$0xff]
    %v95 = vld [vmem:[#allocation7 + $0x80] sm:$0xff]
    %v96 = vld [vmem:[#allocation7 + $0x88] sm:$0xff]
    %v97 = vld [vmem:[#allocation7 + $0x90] sm:$0xff]
    %v98 = vld [vmem:[#allocation7 + $0x98] sm:$0xff]
    %v99 = vld [vmem:[#allocation7 + $0xa0] sm:$0xff]
    %v100 = vld [vmem:[#allocation7 + $0xa8] sm:$0xff]
    %v101 = vld [vmem:[#allocation7 + $0xb0] sm:$0xff]
    %v102 = vld [vmem:[#allocation7 + $0xb8] sm:$0xff]
    %v103 = vld [vmem:[#allocation7 + $0xc0] sm:$0xff]
    %v104 = vld [vmem:[#allocation7 + $0xc8] sm:$0xff]
    %v105 = vld [vmem:[#allocation7 + $0xd0] sm:$0xff]
    %v106 = vld [vmem:[#allocation7 + $0xd8] sm:$0xff]
    %v107 = vld [vmem:[#allocation7 + $0xe0] sm:$0xff]
    %v108 = vld [vmem:[#allocation7 + $0xe8] sm:$0xff]
    %v109 = vld [vmem:[#allocation7 + $0xf0] sm:$0xff]
    %v110 = vld [vmem:[#allocation7 + $0xf8] sm:$0xff]
    %v111 = vld [vmem:[#allocation2] sm:$0xff]
    %v112 = vld [vmem:[#allocation2 + $0x8] sm:$0xff]
    %v113 = vld [vmem:[#allocation2 + $0x10] sm:$0xff]
    %v114 = vld [vmem:[#allocation2 + $0x18] sm:$0xff]
    %v115 = vld [vmem:[#allocation2 + $0x20] sm:$0xff]
    %v116 = vld [vmem:[#allocation2 + $0x28] sm:$0xff]
    %v117 = vld [vmem:[#allocation2 + $0x30] sm:$0xff]
    %v118 = vld [vmem:[#allocation2 + $0x38] sm:$0xff]
    %v119 = vld [vmem:[#allocation2 + $0x40] sm:$0xff]
    %v120 = vld [vmem:[#allocation2 + $0x48] sm:$0xff]
    %v121 = vld [vmem:[#allocation2 + $0x50] sm:$0xff]
    %v122 = vld [vmem:[#allocation2 + $0x58] sm:$0xff]
    %v123 = vld [vmem:[#allocation2 + $0x60] sm:$0xff]
    %v124 = vld [vmem:[#allocation2 + $0x68] sm:$0xff]
    %v125 = vld [vmem:[#allocation2 + $0x70] sm:$0xff]
    %v126 = vld [vmem:[#allocation2 + $0x78] sm:$0xff]
    %v127 = vld [vmem:[#allocation2 + $0x80] sm:$0xff]
    %v128 = vld [vmem:[#allocation2 + $0x88] sm:$0xff]
    %v129 = vld [vmem:[#allocation2 + $0x90] sm:$0xff]
    %v130 = vld [vmem:[#allocation2 + $0x98] sm:$0xff]
    %v131 = vld [vmem:[#allocation2 + $0xa0] sm:$0xff]
    %v132 = vld [vmem:[#allocation2 + $0xa8] sm:$0xff]
    %v133 = vld [vmem:[#allocation2 + $0xb0] sm:$0xff]
    %v134 = vld [vmem:[#allocation2 + $0xb8] sm:$0xff]
    %v135 = vld [vmem:[#allocation2 + $0xc0] sm:$0xff]
    %v136 = vld [vmem:[#allocation2 + $0xc8] sm:$0xff]
    %v137 = vld [vmem:[#allocation2 + $0xd0] sm:$0xff]
    %v138 = vld [vmem:[#allocation2 + $0xd8] sm:$0xff]
    %v139 = vld [vmem:[#allocation2 + $0xe0] sm:$0xff]
    %v140 = vld [vmem:[#allocation2 + $0xe8] sm:$0xff]
    %v141 = vld [vmem:[#allocation2 + $0xf0] sm:$0xff]
    %v142 = vld [vmem:[#allocation2 + $0xf8] sm:$0xff]
    %v143 = vld [vmem:[#allocation5] sm:$0xff]
    %v144 = vld [vmem:[#allocation5 + $0x8] sm:$0xff]
    %v145 = vld [vmem:[#allocation5 + $0x10] sm:$0xff]
    %v146 = vld [vmem:[#allocation5 + $0x18] sm:$0xff]
    %v147 = vld [vmem:[#allocation5 + $0x20] sm:$0xff]
    %v148 = vld [vmem:[#allocation5 + $0x28] sm:$0xff]
    %v149 = vld [vmem:[#allocation5 + $0x30] sm:$0xff]
    %v150 = vld [vmem:[#allocation5 + $0x38] sm:$0xff]
    %v151 = vld [vmem:[#allocation5 + $0x40] sm:$0xff]
    %v152 = vld [vmem:[#allocation5 + $0x48] sm:$0xff]
    %v153 = vld [vmem:[#allocation5 + $0x50] sm:$0xff]
    %v154 = vld [vmem:[#allocation5 + $0x58] sm:$0xff]
    %v155 = vld [vmem:[#allocation5 + $0x60] sm:$0xff]
    %v156 = vld [vmem:[#allocation5 + $0x68] sm:$0xff]
    %v157 = vld [vmem:[#allocation5 + $0x70] sm:$0xff]
    %v158 = vld [vmem:[#allocation5 + $0x78] sm:$0xff]
    %v159 = vld [vmem:[#allocation5 + $0x80] sm:$0xff]
    %v160 = vld [vmem:[#allocation5 + $0x88] sm:$0xff]
    %v161 = vld [vmem:[#allocation5 + $0x90] sm:$0xff]
    %v162 = vld [vmem:[#allocation5 + $0x98] sm:$0xff]
    %v163 = vld [vmem:[#allocation5 + $0xa0] sm:$0xff]
    %v164 = vld [vmem:[#allocation5 + $0xa8] sm:$0xff]
    %v165 = vld [vmem:[#allocation5 + $0xb0] sm:$0xff]
    %v166 = vld [vmem:[#allocation5 + $0xb8] sm:$0xff]
    %v167 = vld [vmem:[#allocation5 + $0xc0] sm:$0xff]
    %v168 = vld [vmem:[#allocation5 + $0xc8] sm:$0xff]
    %v169 = vld [vmem:[#allocation5 + $0xd0] sm:$0xff]
    %v170 = vld [vmem:[#allocation5 + $0xd8] sm:$0xff]
    %v171 = vld [vmem:[#allocation5 + $0xe0] sm:$0xff]
    %v172 = vld [vmem:[#allocation5 + $0xe8] sm:$0xff]
    %v173 = vld [vmem:[#allocation5 + $0xf0] sm:$0xff]
    %v174 = vld [vmem:[#allocation5 + $0xf8] sm:$0xff]
    %v175 = vld [vmem:[#allocation5 + $0x100] sm:$0xff]
    %v176 = vld [vmem:[#allocation5 + $0x108] sm:$0xff]
    %v177 = vld [vmem:[#allocation5 + $0x110] sm:$0xff]
    %v178 = vld [vmem:[#allocation5 + $0x118] sm:$0xff]
    %v179 = vld [vmem:[#allocation5 + $0x120] sm:$0xff]
    %v180 = vld [vmem:[#allocation5 + $0x128] sm:$0xff]
    %v181 = vld [vmem:[#allocation5 + $0x130] sm:$0xff]
    %v182 = vld [vmem:[#allocation5 + $0x138] sm:$0xff]
    %v183 = vld [vmem:[#allocation5 + $0x140] sm:$0xff]
    %v184 = vld [vmem:[#allocation5 + $0x148] sm:$0xff]
    %v185 = vld [vmem:[#allocation5 + $0x150] sm:$0xff]
    %v186 = vld [vmem:[#allocation5 + $0x158] sm:$0xff]
    %v187 = vld [vmem:[#allocation5 + $0x160] sm:$0xff]
    %v188 = vld [vmem:[#allocation5 + $0x168] sm:$0xff]
    %v189 = vld [vmem:[#allocation5 + $0x170] sm:$0xff]
    %v190 = vld [vmem:[#allocation5 + $0x178] sm:$0xff]
    %v191 = vld [vmem:[#allocation5 + $0x180] sm:$0xff]
    %v192 = vld [vmem:[#allocation5 + $0x188] sm:$0xff]
    %v193 = vld [vmem:[#allocation5 + $0x190] sm:$0xff]
    %v194 = vld [vmem:[#allocation5 + $0x198] sm:$0xff]
    %v195 = vld [vmem:[#allocation5 + $0x1a0] sm:$0xff]
    %v196 = vld [vmem:[#allocation5 + $0x1a8] sm:$0xff]
    %v197 = vld [vmem:[#allocation5 + $0x1b0] sm:$0xff]
    %v198 = vld [vmem:[#allocation5 + $0x1b8] sm:$0xff]
    %v199 = vld [vmem:[#allocation5 + $0x1c0] sm:$0xff]
    %v200 = vld [vmem:[#allocation5 + $0x1c8] sm:$0xff]
    %v201 = vld [vmem:[#allocation5 + $0x1d0] sm:$0xff]
    %v202 = vld [vmem:[#allocation5 + $0x1d8] sm:$0xff]
    %v203 = vld [vmem:[#allocation5 + $0x1e0] sm:$0xff]
    %v204 = vld [vmem:[#allocation5 + $0x1e8] sm:$0xff]
    %v205 = vld [vmem:[#allocation5 + $0x1f0] sm:$0xff]
    %v206 = vld [vmem:[#allocation5 + $0x1f8] sm:$0xff]
    %207 = vmatprep.subr.mxu0 %v174
    %208 = vmatpush1.msra.mxu0 %v173
    %209 = vmatprep.subr.mxu0 %v172
    %210 = vmatpush1.msra.mxu0 %v171
    %211 = vmatprep.subr.mxu0 %v170
    %212 = vmatpush1.msra.mxu0 %v169
    %213 = vmatprep.subr.mxu0 %v168
    %214 = vmatpush1.msra.mxu0 %v167
    %215 = vmatprep.subr.mxu0 %v166
    %216 = vmatpush1.msra.mxu0 %v165
    %217 = vmatprep.subr.mxu0 %v164
    %218 = vmatpush1.msra.mxu0 %v163
    %219 = vmatprep.subr.mxu0 %v162
    %220 = vmatpush1.msra.mxu0 %v161
    %221 = vmatprep.subr.mxu0 %v160
    %222 = vmatpush1.msra.mxu0 %v159
    %223 = vmatprep.subr.mxu0 %v158
    %224 = vmatpush1.msra.mxu0 %v157
    %225 = vmatprep.subr.mxu0 %v156
    %226 = vmatpush1.msra.mxu0 %v155
    %227 = vmatprep.subr.mxu0 %v154
    %228 = vmatpush1.msra.mxu0 %v153
    %229 = vmatprep.subr.mxu0 %v152
    %230 = vmatpush1.msra.mxu0 %v151
    %231 = vmatprep.subr.mxu0 %v150
    %232 = vmatpush1.msra.mxu0 %v149
    %233 = vmatprep.subr.mxu0 %v148
    %234 = vmatpush1.msra.mxu0 %v147
    %235 = vmatprep.subr.mxu0 %v146
    %236 = vmatpush1.msra.mxu0 %v145
    %237 = vmatprep.subr.mxu0 %v144
    %238 = vmatpush1.msra.mxu0 %v143
    %239 = vmatprep.subr.mxu0 %v206
    %240 = vmatpush2.msra.mxu0 %v205
    %241 = vmatprep.subr.mxu0 %v204
    %242 = vmatpush2.msra.mxu0 %v203
    %243 = vmatprep.subr.mxu0 %v202
    %244 = vmatpush2.msra.mxu0 %v201
    %245 = vmatprep.subr.mxu0 %v200
    %246 = vmatpush2.msra.mxu0 %v199
    %247 = vmatprep.subr.mxu0 %v198
    %248 = vmatpush2.msra.mxu0 %v197
    %249 = vmatprep.subr.mxu0 %v196
    %250 = vmatpush2.msra.mxu0 %v195
    %251 = vmatprep.subr.mxu0 %v194
    %252 = vmatpush2.msra.mxu0 %v193
    %253 = vmatprep.subr.mxu0 %v192
    %254 = vmatpush2.msra.mxu0 %v191
    %255 = vmatprep.subr.mxu0 %v190
    %256 = vmatpush2.msra.mxu0 %v189
    %257 = vmatprep.subr.mxu0 %v188
    %258 = vmatpush2.msra.mxu0 %v187
    %259 = vmatprep.subr.mxu0 %v186
    %260 = vmatpush2.msra.mxu0 %v185
    %261 = vmatprep.subr.mxu0 %v184
    %262 = vmatpush2.msra.mxu0 %v183
    %263 = vmatprep.subr.mxu0 %v182
    %264 = vmatpush2.msra.mxu0 %v181
    %265 = vmatprep.subr.mxu0 %v180
    %266 = vmatpush2.msra.mxu0 %v179
    %267 = vmatprep.subr.mxu0 %v178
    %268 = vmatpush2.msra.mxu0 %v177
    %269 = vmatprep.subr.mxu0 %v176
    %270 = vmatpush2.msra.mxu0 %v175
    %271 = vmatprep.mubr.f32.mxu0 %v112
    %272 = vmatmul.mubr.f32.gmra.mxu0 %v111
    %v273 = vpop.f32.mrf.mxu0
    %v274 = vadd.f32 0.0, %v273
    %v275 = vpop.f32.mrf.mxu0
    %v276 = vadd.f32 0.0, %v275
    %277 = vmatprep.mubr.f32.mxu0 %v114
    %278 = vmatmul.mubr.f32.gmra.mxu0 %v113
    %v279 = vpop.f32.mrf.mxu0
    %v280 = vadd.f32 0.0, %v279
    %v281 = vpop.f32.mrf.mxu0
    %v282 = vadd.f32 0.0, %v281
    %283 = vmatprep.mubr.f32.mxu0 %v116
    %284 = vmatmul.mubr.f32.gmra.mxu0 %v115
    %v285 = vpop.f32.mrf.mxu0
    %v286 = vadd.f32 0.0, %v285
    %v287 = vpop.f32.mrf.mxu0
    %v288 = vadd.f32 0.0, %v287
    %289 = vmatprep.mubr.f32.mxu0 %v118
    %290 = vmatmul.mubr.f32.gmra.mxu0 %v117
    %v291 = vpop.f32.mrf.mxu0
    %v292 = vadd.f32 0.0, %v291
    %v293 = vpop.f32.mrf.mxu0
    %v294 = vadd.f32 0.0, %v293
    %295 = vmatprep.mubr.f32.mxu0 %v120
    %296 = vmatmul.mubr.f32.gmra.mxu0 %v119
    %v297 = vpop.f32.mrf.mxu0
    %v298 = vadd.f32 0.0, %v297
    %v299 = vpop.f32.mrf.mxu0
    %v300 = vadd.f32 0.0, %v299
    %301 = vmatprep.mubr.f32.mxu0 %v122
    %302 = vmatmul.mubr.f32.gmra.mxu0 %v121
    %v303 = vpop.f32.mrf.mxu0
    %v304 = vadd.f32 0.0, %v303
    %v305 = vpop.f32.mrf.mxu0
    %v306 = vadd.f32 0.0, %v305
    %307 = vmatprep.mubr.f32.mxu0 %v124
    %308 = vmatmul.mubr.f32.gmra.mxu0 %v123
    %v309 = vpop.f32.mrf.mxu0
    %v310 = vadd.f32 0.0, %v309
    %v311 = vpop.f32.mrf.mxu0
    %v312 = vadd.f32 0.0, %v311
    %313 = vmatprep.mubr.f32.mxu0 %v126
    %314 = vmatmul.mubr.f32.gmra.mxu0 %v125
    %v315 = vpop.f32.mrf.mxu0
    %v316 = vadd.f32 0.0, %v315
    %v317 = vpop.f32.mrf.mxu0
    %v318 = vadd.f32 0.0, %v317
    %319 = vmatprep.mubr.f32.mxu0 %v128
    %320 = vmatmul.mubr.f32.gmra.mxu0 %v127
    %v321 = vpop.f32.mrf.mxu0
    %v322 = vadd.f32 0.0, %v321
    %v323 = vpop.f32.mrf.mxu0
    %v324 = vadd.f32 0.0, %v323
    %325 = vmatprep.mubr.f32.mxu0 %v130
    %326 = vmatmul.mubr.f32.gmra.mxu0 %v129
    %v327 = vpop.f32.mrf.mxu0
    %v328 = vadd.f32 0.0, %v327
    %v329 = vpop.f32.mrf.mxu0
    %v330 = vadd.f32 0.0, %v329
    %331 = vmatprep.mubr.f32.mxu0 %v132
    %332 = vmatmul.mubr.f32.gmra.mxu0 %v131
    %v333 = vpop.f32.mrf.mxu0
    %v334 = vadd.f32 0.0, %v333
    %v335 = vpop.f32.mrf.mxu0
    %v336 = vadd.f32 0.0, %v335
    %337 = vmatprep.mubr.f32.mxu0 %v134
    %338 = vmatmul.mubr.f32.gmra.mxu0 %v133
    %v339 = vpop.f32.mrf.mxu0
    %v340 = vadd.f32 0.0, %v339
    %v341 = vpop.f32.mrf.mxu0
    %v342 = vadd.f32 0.0, %v341
    %343 = vmatprep.mubr.f32.mxu0 %v136
    %344 = vmatmul.mubr.f32.gmra.mxu0 %v135
    %v345 = vpop.f32.mrf.mxu0
    %v346 = vadd.f32 0.0, %v345
    %v347 = vpop.f32.mrf.mxu0
    %v348 = vadd.f32 0.0, %v347
    %349 = vmatprep.mubr.f32.mxu0 %v138
    %350 = vmatmul.mubr.f32.gmra.mxu0 %v137
    %v351 = vpop.f32.mrf.mxu0
    %v352 = vadd.f32 0.0, %v351
    %v353 = vpop.f32.mrf.mxu0
    %v354 = vadd.f32 0.0, %v353
    %355 = vmatprep.mubr.f32.mxu0 %v140
    %356 = vmatmul.mubr.f32.gmra.mxu0 %v139
    %v357 = vpop.f32.mrf.mxu0
    %v358 = vadd.f32 0.0, %v357
    %v359 = vpop.f32.mrf.mxu0
    %v360 = vadd.f32 0.0, %v359
    %361 = vmatprep.mubr.f32.mxu0 %v142
    %362 = vmatmul.mubr.f32.gmra.mxu0 %v141
    %v363 = vpop.f32.mrf.mxu0
    %v364 = vadd.f32 0.0, %v363
    %v365 = vpop.f32.mrf.mxu0
    %v366 = vadd.f32 0.0, %v365
    %367 = vdwg.mxu0
    %v368 = vadd.f32 %v79, %v274
    %v369 = vadd.f32 %v80, %v276
    %v370 = vadd.f32 %v81, %v280
    %v371 = vadd.f32 %v82, %v282
    %v372 = vadd.f32 %v83, %v286
    %v373 = vadd.f32 %v84, %v288
    %v374 = vadd.f32 %v85, %v292
    %v375 = vadd.f32 %v86, %v294
    %v376 = vadd.f32 %v87, %v298
    %v377 = vadd.f32 %v88, %v300
    %v378 = vadd.f32 %v89, %v304
    %v379 = vadd.f32 %v90, %v306
    %v380 = vadd.f32 %v91, %v310
    %v381 = vadd.f32 %v92, %v312
    %v382 = vadd.f32 %v93, %v316
    %v383 = vadd.f32 %v94, %v318
    %v384 = vadd.f32 %v95, %v322
    %v385 = vadd.f32 %v96, %v324
    %v386 = vadd.f32 %v97, %v328
    %v387 = vadd.f32 %v98, %v330
    %v388 = vadd.f32 %v99, %v334
    %v389 = vadd.f32 %v100, %v336
    %v390 = vadd.f32 %v101, %v340
    %v391 = vadd.f32 %v102, %v342
    %v392 = vadd.f32 %v103, %v346
    %v393 = vadd.f32 %v104, %v348
    %v394 = vadd.f32 %v105, %v352
    %v395 = vadd.f32 %v106, %v354
    %v396 = vadd.f32 %v107, %v358
    %v397 = vadd.f32 %v108, %v360
    %v398 = vadd.f32 %v109, %v364
    %v399 = vadd.f32 %v110, %v366
    %400 = vst [vmem:[#allocation7] sm:$0xff] %v368
    %401 = vst [vmem:[#allocation7 + $0x8] sm:$0xff] %v369
    %402 = vst [vmem:[#allocation7 + $0x10] sm:$0xff] %v370
    %403 = vst [vmem:[#allocation7 + $0x18] sm:$0xff] %v371
    %404 = vst [vmem:[#allocation7 + $0x20] sm:$0xff] %v372
    %405 = vst [vmem:[#allocation7 + $0x28] sm:$0xff] %v373
    %406 = vst [vmem:[#allocation7 + $0x30] sm:$0xff] %v374
    %407 = vst [vmem:[#allocation7 + $0x38] sm:$0xff] %v375
    %408 = vst [vmem:[#allocation7 + $0x40] sm:$0xff] %v376
    %409 = vst [vmem:[#allocation7 + $0x48] sm:$0xff] %v377
    %410 = vst [vmem:[#allocation7 + $0x50] sm:$0xff] %v378
    %411 = vst [vmem:[#allocation7 + $0x58] sm:$0xff] %v379
    %412 = vst [vmem:[#allocation7 + $0x60] sm:$0xff] %v380
    %413 = vst [vmem:[#allocation7 + $0x68] sm:$0xff] %v381
    %414 = vst [vmem:[#allocation7 + $0x70] sm:$0xff] %v382
    %415 = vst [vmem:[#allocation7 + $0x78] sm:$0xff] %v383
    %416 = vst [vmem:[#allocation7 + $0x80] sm:$0xff] %v384
    %417 = vst [vmem:[#allocation7 + $0x88] sm:$0xff] %v385
    %418 = vst [vmem:[#allocation7 + $0x90] sm:$0xff] %v386
    %419 = vst [vmem:[#allocation7 + $0x98] sm:$0xff] %v387
    %420 = vst [vmem:[#allocation7 + $0xa0] sm:$0xff] %v388
    %421 = vst [vmem:[#allocation7 + $0xa8] sm:$0xff] %v389
    %422 = vst [vmem:[#allocation7 + $0xb0] sm:$0xff] %v390
    %423 = vst [vmem:[#allocation7 + $0xb8] sm:$0xff] %v391
    %424 = vst [vmem:[#allocation7 + $0xc0] sm:$0xff] %v392
    %425 = vst [vmem:[#allocation7 + $0xc8] sm:$0xff] %v393
    %426 = vst [vmem:[#allocation7 + $0xd0] sm:$0xff] %v394
    %427 = vst [vmem:[#allocation7 + $0xd8] sm:$0xff] %v395
    %428 = vst [vmem:[#allocation7 + $0xe0] sm:$0xff] %v396
    %429 = vst [vmem:[#allocation7 + $0xe8] sm:$0xff] %v397
    %430 = vst [vmem:[#allocation7 + $0xf0] sm:$0xff] %v398
    %431 = vst [vmem:[#allocation7 + $0xf8] sm:$0xff] %v399
    // Predicated region
    $region26: #{tpu_custom_call.1} parent=1 // pred_check
      %p432 = pneg %p43
    $region27: #{tpu_custom_call.1} parent=1 // pred_check_branch
      %434 = sbr.rel (%p432) target = $region29
    $region28: #{tpu_custom_call.1} parent=1 // pred_region
      %v435 = vld [vmem:[#allocation7] sm:$0xff]
      %v436 = vld [vmem:[#allocation7 + $0x8] sm:$0xff]
      %v437 = vld [vmem:[#allocation7 + $0x10] sm:$0xff]
      %v438 = vld [vmem:[#allocation7 + $0x18] sm:$0xff]
      %v439 = vld [vmem:[#allocation7 + $0x20] sm:$0xff]
      %v440 = vld [vmem:[#allocation7 + $0x28] sm:$0xff]
      %v441 = vld [vmem:[#allocation7 + $0x30] sm:$0xff]
      %v442 = vld [vmem:[#allocation7 + $0x38] sm:$0xff]
      %v443 = vld [vmem:[#allocation7 + $0x40] sm:$0xff]
      %v444 = vld [vmem:[#allocation7 + $0x48] sm:$0xff]
      %v445 = vld [vmem:[#allocation7 + $0x50] sm:$0xff]
      %v446 = vld [vmem:[#allocation7 + $0x58] sm:$0xff]
      %v447 = vld [vmem:[#allocation7 + $0x60] sm:$0xff]
      %v448 = vld [vmem:[#allocation7 + $0x68] sm:$0xff]
      %v449 = vld [vmem:[#allocation7 + $0x70] sm:$0xff]
      %v450 = vld [vmem:[#allocation7 + $0x78] sm:$0xff]
      %v451 = vld [vmem:[#allocation7 + $0x80] sm:$0xff]
      %v452 = vld [vmem:[#allocation7 + $0x88] sm:$0xff]
      %v453 = vld [vmem:[#allocation7 + $0x90] sm:$0xff]
      %v454 = vld [vmem:[#allocation7 + $0x98] sm:$0xff]
      %v455 = vld [vmem:[#allocation7 + $0xa0] sm:$0xff]
      %v456 = vld [vmem:[#allocation7 + $0xa8] sm:$0xff]
      %v457 = vld [vmem:[#allocation7 + $0xb0] sm:$0xff]
      %v458 = vld [vmem:[#allocation7 + $0xb8] sm:$0xff]
      %v459 = vld [vmem:[#allocation7 + $0xc0] sm:$0xff]
      %v460 = vld [vmem:[#allocation7 + $0xc8] sm:$0xff]
      %v461 = vld [vmem:[#allocation7 + $0xd0] sm:$0xff]
      %v462 = vld [vmem:[#allocation7 + $0xd8] sm:$0xff]
      %v463 = vld [vmem:[#allocation7 + $0xe0] sm:$0xff]
      %v464 = vld [vmem:[#allocation7 + $0xe8] sm:$0xff]
      %v465 = vld [vmem:[#allocation7 + $0xf0] sm:$0xff]
      %v466 = vld [vmem:[#allocation7 + $0xf8] sm:$0xff]
      %v467 = vld [vmem:[%s2] sm:$0x3]
      %v469 = vlaneseq
      %v470 = vshrl.u32 %v469, 7
      %v471 = vsub.s32 0, %v470
      %v472 = vrot.slane %v467, %v471
      %v473 = vlaneseq
      %v474 = vshrl.u32 %v473, 7
      %v475 = vsub.s32 1, %v474
      %v476 = vrot.slane %v467, %v475
      %v479 = vadd.f32 %v435, %v472
      %v480 = vadd.f32 %v436, %v476
      %v481 = vadd.f32 %v437, %v472
      %v482 = vadd.f32 %v438, %v476
      %v483 = vadd.f32 %v439, %v472
      %v484 = vadd.f32 %v440, %v476
      %v485 = vadd.f32 %v441, %v472
      %v486 = vadd.f32 %v442, %v476
      %v487 = vadd.f32 %v443, %v472
      %v488 = vadd.f32 %v444, %v476
      %v489 = vadd.f32 %v445, %v472
      %v490 = vadd.f32 %v446, %v476
      %v491 = vadd.f32 %v447, %v472
      %v492 = vadd.f32 %v448, %v476
      %v493 = vadd.f32 %v449, %v472
      %v494 = vadd.f32 %v450, %v476
      %v495 = vadd.f32 %v451, %v472
      %v496 = vadd.f32 %v452, %v476
      %v497 = vadd.f32 %v453, %v472
      %v498 = vadd.f32 %v454, %v476
      %v499 = vadd.f32 %v455, %v472
      %v500 = vadd.f32 %v456, %v476
      %v501 = vadd.f32 %v457, %v472
      %v502 = vadd.f32 %v458, %v476
      %v503 = vadd.f32 %v459, %v472
      %v504 = vadd.f32 %v460, %v476
      %v505 = vadd.f32 %v461, %v472
      %v506 = vadd.f32 %v462, %v476
      %v507 = vadd.f32 %v463, %v472
      %v508 = vadd.f32 %v464, %v476
      %v509 = vadd.f32 %v465, %v472
      %v510 = vadd.f32 %v466, %v476
      %511 = vst [vmem:[#allocation7] sm:$0xff] %v479
      %512 = vst [vmem:[#allocation7 + $0x8] sm:$0xff] %v480
      %513 = vst [vmem:[#allocation7 + $0x10] sm:$0xff] %v481
      %514 = vst [vmem:[#allocation7 + $0x18] sm:$0xff] %v482
      %515 = vst [vmem:[#allocation7 + $0x20] sm:$0xff] %v483
      %516 = vst [vmem:[#allocation7 + $0x28] sm:$0xff] %v484
      %517 = vst [vmem:[#allocation7 + $0x30] sm:$0xff] %v485
      %518 = vst [vmem:[#allocation7 + $0x38] sm:$0xff] %v486
      %519 = vst [vmem:[#allocation7 + $0x40] sm:$0xff] %v487
      %520 = vst [vmem:[#allocation7 + $0x48] sm:$0xff] %v488
      %521 = vst [vmem:[#allocation7 + $0x50] sm:$0xff] %v489
      %522 = vst [vmem:[#allocation7 + $0x58] sm:$0xff] %v490
      %523 = vst [vmem:[#allocation7 + $0x60] sm:$0xff] %v491
      %524 = vst [vmem:[#allocation7 + $0x68] sm:$0xff] %v492
      %525 = vst [vmem:[#allocation7 + $0x70] sm:$0xff] %v493
      %526 = vst [vmem:[#allocation7 + $0x78] sm:$0xff] %v494
      %527 = vst [vmem:[#allocation7 + $0x80] sm:$0xff] %v495
      %528 = vst [vmem:[#allocation7 + $0x88] sm:$0xff] %v496
      %529 = vst [vmem:[#allocation7 + $0x90] sm:$0xff] %v497
      %530 = vst [vmem:[#allocation7 + $0x98] sm:$0xff] %v498
      %531 = vst [vmem:[#allocation7 + $0xa0] sm:$0xff] %v499
      %532 = vst [vmem:[#allocation7 + $0xa8] sm:$0xff] %v500
      %533 = vst [vmem:[#allocation7 + $0xb0] sm:$0xff] %v501
      %534 = vst [vmem:[#allocation7 + $0xb8] sm:$0xff] %v502
      %535 = vst [vmem:[#allocation7 + $0xc0] sm:$0xff] %v503
      %536 = vst [vmem:[#allocation7 + $0xc8] sm:$0xff] %v504
      %537 = vst [vmem:[#allocation7 + $0xd0] sm:$0xff] %v505
      %538 = vst [vmem:[#allocation7 + $0xd8] sm:$0xff] %v506
      %539 = vst [vmem:[#allocation7 + $0xe0] sm:$0xff] %v507
      %540 = vst [vmem:[#allocation7 + $0xe8] sm:$0xff] %v508
      %541 = vst [vmem:[#allocation7 + $0xf0] sm:$0xff] %v509
      %542 = vst [vmem:[#allocation7 + $0xf8] sm:$0xff] %v510
    $region29: #{tpu_custom_call.1} parent=1 // pred_fallthru
      _
    // Predicated region
    $region30: #{tpu_custom_call.1} parent=1 // pred_check
      _
    $region31: #{tpu_custom_call.1} parent=1 // pred_check_branch
      %544 = sbr.rel (0) target = $region33
    $region32: #{tpu_custom_call.1} parent=1 // pred_region
      %s546 = ssub.s32 4096, 4096
      %547 = vsyncadd [#allocation4], %s546
      %s548 = sshll.u32 [#allocation7], 4
      %s549 = int_to_ptr.vmem [resolvable:$true] %s548
      %554 = dma.vmem_to_hbm [thread:$0]  %s549, 4096, %s3, [#allocation4], 256, 256, 16
    $region33: #{tpu_custom_call.1} parent=1 // pred_fallthru
      _
    // Predicated region
    $region34: #{tpu_custom_call.1} parent=1 // pred_check
      _
    $region35: #{tpu_custom_call.1} parent=1 // pred_check_branch
      %556 = sbr.rel (0) target = $region37
    $region36: #{tpu_custom_call.1} parent=1 // pred_region
      %557 = dma.done [#allocation4], 4096
    $region37: #{tpu_custom_call.1} parent=1 // pred_fallthru
      _
    %558 = vsyncpa [#allocation3], 1
    %559 = vsyncpa [#allocation6], 1
    %560 = vsyncpa [#allocation4], 1

</llo_original>
